<compile_context>
chip_gen: v7x
topology: tpu7x:2x2x1
jax: 0.10.0
libtpu: 0.0.40
codegen_flags: <defaults>
</compile_context>

<pallas_src>
import functools

import jax
import jax.numpy as jnp
from jax import lax
from jax.experimental import pallas as pl
from jax.experimental.pallas import tpu as pltpu


# ------------------------------- helpers ----------------------------------- #
def _round_up(x, m):
    return (x + m - 1) // m * m


def _pad_gate_cols(a, num_hid, num_hid_pad):
    """Pad the last axis, laid out as [r | z | n] blocks of width num_hid,
    so every gate block has width num_hid_pad (zero fill -> padded hidden
    columns provably stay zero through the recurrence)."""
    if num_hid_pad == num_hid:
        return a
    pad = [(0, 0)] * (a.ndim - 1) + [(0, num_hid_pad - num_hid)]
    return jnp.concatenate(
        [jnp.pad(p, pad) for p in jnp.split(a, 3, axis=-1)], axis=-1)


def _vmem_limit_bytes(estimate):
    """Scoped VMEM limit: never below the 32 MiB default, capped at 64 MiB
    (v7x physical VMEM per TensorCore)."""
    return int(max(32 * 1024 * 1024, min(estimate, 64 * 1024 * 1024)))


def _gru_update(gi, gh, h_prev, num_hid):
    """One GRU cell update in f32.  gi/gh: (B, 3H), PyTorch (r, z, n) order."""
    H = num_hid
    i_r, i_z, i_n = gi[:, :H], gi[:, H:2 * H], gi[:, 2 * H:]
    h_r, h_z, h_n = gh[:, :H], gh[:, H:2 * H], gh[:, 2 * H:]
    r = jax.nn.sigmoid(i_r + h_r)        # EUP
    z = jax.nn.sigmoid(i_z + h_z)        # EUP
    n = jnp.tanh(i_n + r * h_n)          # EUP + VPU
    return n + z * (h_prev - n)          # == (1 - z) * n + z * h_prev


# ----------------------------- Pallas kernels ------------------------------ #
def _gru_resident_kernel(gi_ref, whh_ref, bhh_ref, out_ref, *, num_hid, seq_len):
    """Whole sequence of one direction in a single invocation (small problems).

    gi_ref : (T, B, 3H) f32  hoisted x-projection (b_ih already folded in)
    whh_ref: (H, 3H)         matmul-dtype (f32 or bf16) W_hh^T
    bhh_ref: (1, 3H) f32
    out_ref: (B, H)          final hidden state
    """
    whh = whh_ref[...]
    bhh = bhh_ref[...]
    batch = out_ref.shape[0]

    def step(t, h):
        gh = jnp.dot(h.astype(whh.dtype), whh,
                     preferred_element_type=jnp.float32) + bhh
        return _gru_update(gi_ref[t], gh, h, num_hid)

    h_final = lax.fori_loop(0, seq_len, step,
                            jnp.zeros((batch, num_hid), jnp.float32))
    out_ref[...] = h_final.astype(out_ref.dtype)


def _gru_stream_kernel(gi_ref, whh_ref, bhh_ref, out_ref, h_scratch, *, num_hid):
    """One grid step == one GRU time step; grid = (ndirections, T).

    gi_ref : (B, 3H) f32 block for this (direction, t)
    whh_ref: (H, 3H) resident W_hh^T, bhh_ref: (1, 3H) f32
    out_ref: (B, H), written only on the last time step
    h_scratch: (B, H) f32 hidden state carried across the "arbitrary" t axis
    """
    t = pl.program_id(1)

    @pl.when(t == 0)
    def _():
        h_scratch[...] = jnp.zeros_like(h_scratch)

    h_prev = h_scratch[...]                                   # (B, H) f32
    gh = jnp.dot(h_prev.astype(whh_ref.dtype), whh_ref[...],
                 preferred_element_type=jnp.float32) + bhh_ref[...]
    h_new = _gru_update(gi_ref[...], gh, h_prev, num_hid)
    h_scratch[...] = h_new

    @pl.when(t == pl.num_programs(1) - 1)
    def _():
        out_ref[...] = h_new.astype(out_ref.dtype)            # reg value, no reload


# ------------------------------ call wrappers ------------------------------ #
def gru_last_hidden_resident(gi, w_hh_t, b_hh, *, num_hid, out_dtype):
    """gi: (ndir, T, B, 3H) f32; w_hh_t: (ndir, H, 3H); b_hh: (ndir, 1, 3H)."""
    ndir, seq_len, batch, g = gi.shape
    assert g == 3 * num_hid
    kernel = functools.partial(_gru_resident_kernel,
                               num_hid=num_hid, seq_len=seq_len)
    est = 2 * (gi.size * gi.dtype.itemsize
               + w_hh_t.size * w_hh_t.dtype.itemsize) + (8 << 20)
    return pl.pallas_call(
        kernel,
        out_shape=jax.ShapeDtypeStruct((ndir, batch, num_hid), out_dtype),
        grid=(ndir,),
        in_specs=[
            pl.BlockSpec((None, seq_len, batch, g), lambda d: (d, 0, 0, 0)),
            pl.BlockSpec((None, num_hid, g), lambda d: (d, 0, 0)),
            pl.BlockSpec((None, 1, g), lambda d: (d, 0, 0)),
        ],
        out_specs=pl.BlockSpec((None, batch, num_hid), lambda d: (d, 0, 0)),
        compiler_params=pltpu.CompilerParams(
            dimension_semantics=("parallel",),        # both v7x TCs when ndir == 2
            vmem_limit_bytes=_vmem_limit_bytes(est)),
    )(gi, w_hh_t, b_hh)


def gru_last_hidden_stream(gi, w_hh_t, b_hh, *, num_hid, out_dtype):
    """Streaming version for large T*B: gi blocks are pipelined over grid=(ndir, T)."""
    ndir, seq_len, batch, g = gi.shape
    assert g == 3 * num_hid
    kernel = functools.partial(_gru_stream_kernel, num_hid=num_hid)
    est = (2 * batch * g * 4                                   # gi double-buffered
           + 2 * (num_hid + 1) * g * w_hh_t.dtype.itemsize     # weights/bias
           + batch * num_hid * 8 + (8 << 20))

    def run(single_buffer_weights):
        # W_hh^T / b_hh are resident; with a constant index map (ndir == 1) a
        # single pipeline buffer halves their VMEM footprint at zero cost.
        wkw = dict(pipeline_mode=pl.Buffered(1)) if single_buffer_weights else {}
        return pl.pallas_call(
            kernel,
            out_shape=jax.ShapeDtypeStruct((ndir, batch, num_hid), out_dtype),
            grid=(ndir, seq_len),
            in_specs=[
                pl.BlockSpec((None, None, batch, g), lambda d, t: (d, t, 0, 0)),
                pl.BlockSpec((None, num_hid, g), lambda d, t: (d, 0, 0), **wkw),
                pl.BlockSpec((None, 1, g), lambda d, t: (d, 0, 0), **wkw),
            ],
            out_specs=pl.BlockSpec((None, batch, num_hid), lambda d, t: (d, 0, 0)),
            scratch_shapes=[pltpu.VMEM((batch, num_hid), jnp.float32)],
            compiler_params=pltpu.CompilerParams(
                dimension_semantics=("parallel", "arbitrary"),
                vmem_limit_bytes=_vmem_limit_bytes(est)),
        )(gi, w_hh_t, b_hh)

    if ndir == 1 and hasattr(pl, "Buffered"):
        try:
            return run(True)
        except Exception:
            pass   # graceful fallback if this JAX build rejects Buffered(1)
    return run(False)


# --------------------------- Module equivalent ----------------------------- #
class QuestionEmbedding:
    """JAX / Pallas port of the PyTorch QuestionEmbedding module (GRU path)."""

    def __init__(self, in_dim, num_hid, nlayers, bidirect, dropout,
                 rnn_type='GRU', key=None, matmul_dtype=jnp.bfloat16):
        assert rnn_type in ('GRU', 'LSTM')
        assert rnn_type == 'GRU', "TODO(synk): LSTM path not implemented"
        assert nlayers == 1, "TODO(synk): nlayers > 1 (with dropout) not implemented"
        self.in_dim = in_dim
        self.num_hid = num_hid
        self.nlayers = nlayers
        self.ndirections = 1 + int(bidirect)
        self.rnn_type = rnn_type
        self.dropout = dropout                 # unused for nlayers == 1
        self.matmul_dtype = matmul_dtype       # MXU operand dtype (state/acc stay f32)

        if key is None:
            key = jax.random.PRNGKey(0)
        k = 1.0 / float(num_hid) ** 0.5
        self.params = []
        for _ in range(self.ndirections):
            key, k1, k2, k3, k4 = jax.random.split(key, 5)
            self.params.append(dict(
                w_ih=jax.random.uniform(k1, (3 * num_hid, in_dim), jnp.float32, -k, k),
                w_hh=jax.random.uniform(k2, (3 * num_hid, num_hid), jnp.float32, -k, k),
                b_ih=jax.random.uniform(k3, (3 * num_hid,), jnp.float32, -k, k),
                b_hh=jax.random.uniform(k4, (3 * num_hid,), jnp.float32, -k, k)))

        # Pre-transpose / pad / stack parameters for the kernels.
        self.num_hid_pad = _round_up(num_hid, 128)   # lane-aligned gate slices
        Hp = self.num_hid_pad
        w_ih_t, w_hh_t, b_ih_p, b_hh_p = [], [], [], []
        for p in self.params:
            w_ih_t.append(_pad_gate_cols(p['w_ih'].T, num_hid, Hp))        # (D, 3Hp)
            whh = _pad_gate_cols(p['w_hh'].T, num_hid, Hp)                 # (H, 3Hp)
            w_hh_t.append(jnp.pad(whh, ((0, Hp - num_hid), (0, 0))))       # (Hp, 3Hp)
            b_ih_p.append(_pad_gate_cols(p['b_ih'], num_hid, Hp))          # (3Hp,)
            b_hh_p.append(_pad_gate_cols(p['b_hh'], num_hid, Hp))          # (3Hp,)
        self.w_ih_t = jnp.stack(w_ih_t)                                    # (ndir, D, 3Hp)
        self.w_hh_t = jnp.stack(w_hh_t)                                    # (ndir, Hp, 3Hp)
        self.b_ih_p = jnp.stack(b_ih_p)[:, None, None, :]                  # (ndir,1,1,3Hp)
        self.b_hh_p = jnp.stack(b_hh_p)[:, None, :]                        # (ndir,1,3Hp)

    def forward(self, x, *, stream=None):
        """x: (B, T, in_dim), batch_first like the PyTorch module."""
        batch, seq_len, _ = x.shape
        H, Hp = self.num_hid, self.num_hid_pad
        md = self.matmul_dtype
        sub = 32 // jnp.dtype(md).itemsize          # 8 for f32, 16 for bf16 packing
        batch_pad = _round_up(batch, sub)

        # Time-major, stacked over directions (backward direction == reversed time).
        x_tm = jnp.swapaxes(x, 0, 1)                                 # (T, B, D)
        if self.ndirections == 1:
            xs = x_tm[None]
        else:
            xs = jnp.stack((x_tm, x_tm[::-1]), axis=0)               # (2, T, B, D)
        if batch_pad != batch:
            xs = jnp.pad(xs, ((0, 0), (0, 0), (0, batch_pad - batch), (0, 0)))

        # Hoisted input projection: one big parallel matmul off the serial path.
        gi = jnp.einsum('dtbi,dig->dtbg', xs.astype(md), self.w_ih_t.astype(md),
                        preferred_element_type=jnp.float32) + self.b_ih_p

        if stream is None:    # keep gi fully VMEM-resident only when it is small
            stream = gi.size * 4 > 4 * 1024 * 1024
        runner = gru_last_hidden_stream if stream else gru_last_hidden_resident
        out = runner(gi, self.w_hh_t.astype(md), self.b_hh_p,
                     num_hid=Hp, out_dtype=x.dtype)                  # (ndir, Bp, Hp)

        out = out[:, :batch, :H]
        if self.ndirections == 1:
            return out[0]
        return jnp.concatenate((out[0], out[1]), axis=1)             # (B, 2H)

    # TODO(synk): forward_all (full per-step output sequence) not implemented.


# ------------------------------ JAX reference ------------------------------ #
def gru_ref_last_hidden(x_btd, w_ih, w_hh, b_ih, b_hh):
    H = w_hh.shape[1]

    def step(h, x_t):
        gi = x_t @ w_ih.T + b_ih
        gh = h @ w_hh.T + b_hh
        i_r, i_z, i_n = jnp.split(gi, 3, axis=-1)
        h_r, h_z, h_n = jnp.split(gh, 3, axis=-1)
        r = jax.nn.sigmoid(i_r + h_r)
        z = jax.nn.sigmoid(i_z + h_z)
        n = jnp.tanh(i_n + r * h_n)
        return (1.0 - z) * n + z * h, None

    h0 = jnp.zeros((x_btd.shape[0], H), x_btd.dtype)
    h_final, _ = lax.scan(step, h0, jnp.swapaxes(x_btd, 0, 1))
    return h_final


# ---------------------------------- main ----------------------------------- #
if __name__ == "__main__":
    B, T, IN_DIM, NUM_HID = 2, 8, 32, 32
    root = jax.random.PRNGKey(0)
    kx, kp1, kp2 = jax.random.split(root, 3)
    x = jax.random.normal(kx, (B, T, IN_DIM), jnp.float32)

    # unidirectional, f32 MXU operands: tight check of both execution paths
    qe = QuestionEmbedding(IN_DIM, NUM_HID, nlayers=1, bidirect=False,
                           dropout=0.0, rnn_type='GRU', key=kp1,
                           matmul_dtype=jnp.float32)
    ref = gru_ref_last_hidden(x, **qe.params[0])
    out_res = qe.forward(x, stream=False)     # single-invocation fori_loop path
    out_str = qe.forward(x, stream=True)      # streaming grid=(ndir, T) path
    jax.block_until_ready((out_res, out_str))
    assert out_res.shape == (B, NUM_HID)
    assert jnp.allclose(out_res, ref, atol=1e-4, rtol=1e-4)
    assert jnp.allclose(out_str, ref, atol=1e-4, rtol=1e-4)

    # bidirectional, default bf16 MXU operands (f32 state & accumulation)
    qe_bi = QuestionEmbedding(IN_DIM, NUM_HID, nlayers=1, bidirect=True,
                              dropout=0.0, rnn_type='GRU', key=kp2)
    ref_bi = jnp.concatenate(
        (gru_ref_last_hidden(x, **qe_bi.params[0]),
         gru_ref_last_hidden(x[:, ::-1, :], **qe_bi.params[1])), axis=1)
    out_bi_res = qe_bi.forward(x, stream=False)
    out_bi_str = qe_bi.forward(x, stream=True)
    jax.block_until_ready((out_bi_res, out_bi_str))
    assert out_bi_res.shape == (B, 2 * NUM_HID)
    assert jnp.allclose(out_bi_res, ref_bi, atol=3e-2, rtol=3e-2)
    assert jnp.allclose(out_bi_str, ref_bi, atol=3e-2, rtol=3e-2)

    print("KERNEL_OK")
</pallas_src>

<mosaic_0001>
module attributes {stable_mosaic.version = 11 : i64} {
  func.func @_gru_resident_kernel(%arg0: i32, %arg1: memref<1x8x8x384xf32, #tpu.memory_space<vmem>>, %arg2: memref<1x128x384xf32, #tpu.memory_space<vmem>>, %arg3: memref<1x1x384xf32, #tpu.memory_space<vmem>>, %arg4: memref<1x8x128xf32, #tpu.memory_space<vmem>>) attributes {dimension_semantics = [#tpu.dimension_semantics<parallel>], iteration_bounds = array<i64: 1>, scalar_prefetch = 0 : i64, scratch_operands = 0 : i64, tpu.core_type = #tpu.core_type<tc>, window_params = [{transform_indices = @transform_0, window_bounds = array<i64: 1, 8, 8, 384>}, {transform_indices = @transform_1, window_bounds = array<i64: 1, 128, 384>}, {transform_indices = @transform_2, window_bounds = array<i64: 1, 1, 384>}, {transform_indices = @transform_3, window_bounds = array<i64: 1, 8, 128>}]} {
    %c0 = arith.constant 0 : index
    %c0_0 = arith.constant 0 : index
    %c0_1 = arith.constant 0 : index
    %0 = vector.load %arg2[%c0, %c0_0, %c0_1] : memref<1x128x384xf32, #tpu.memory_space<vmem>>, vector<1x128x384xf32>
    %1 = vector.shape_cast %0 : vector<1x128x384xf32> to vector<128x384xf32>
    %c0_2 = arith.constant 0 : index
    %c0_3 = arith.constant 0 : index
    %c0_4 = arith.constant 0 : index
    %2 = vector.load %arg3[%c0_2, %c0_3, %c0_4] : memref<1x1x384xf32, #tpu.memory_space<vmem>>, vector<1x1x384xf32>
    %3 = vector.shape_cast %2 : vector<1x1x384xf32> to vector<1x384xf32>
    %cst = arith.constant 0.000000e+00 : f32
    %4 = vector.broadcast %cst : f32 to vector<8x128xf32>
    %c0_i32 = arith.constant 0 : i32
    %c8_i32 = arith.constant 8 : i32
    %5 = arith.addi %c0_i32, %c8_i32 : i32
    %c1_i32 = arith.constant 1 : i32
    %6 = scf.for %arg5 = %c0_i32 to %5 step %c1_i32 iter_args(%arg6 = %4) -> (vector<8x128xf32>)  : i32 {
      %cst_9 = arith.constant dense<0.000000e+00> : vector<8x384xf32>
      %10 = tpu.matmul %arg6, %1, %cst_9 {dimension_numbers = #tpu.dot_dimension_numbers<[1], [0], [0], [1], [0, 0, 1, 1], [], []>} : vector<8x128xf32>, vector<128x384xf32>, vector<8x384xf32> -> vector<8x384xf32>
      %11 = vector.broadcast %3 : vector<1x384xf32> to vector<8x384xf32>
      %12 = arith.addf %10, %11 : vector<8x384xf32>
      %c0_10 = arith.constant 0 : index
      %13 = arith.index_cast %arg5 : i32 to index
      %c0_11 = arith.constant 0 : index
      %c0_12 = arith.constant 0 : index
      %14 = vector.load %arg1[%c0_10, %13, %c0_11, %c0_12] : memref<1x8x8x384xf32, #tpu.memory_space<vmem>>, vector<1x1x8x384xf32>
      %15 = vector.shape_cast %14 : vector<1x1x8x384xf32> to vector<8x384xf32>
      %16 = vector.extract_strided_slice %15 {offsets = [0, 0], sizes = [8, 128], strides = [1, 1]} : vector<8x384xf32> to vector<8x128xf32>
      %17 = vector.extract_strided_slice %15 {offsets = [0, 128], sizes = [8, 128], strides = [1, 1]} : vector<8x384xf32> to vector<8x128xf32>
      %18 = vector.extract_strided_slice %15 {offsets = [0, 256], sizes = [8, 128], strides = [1, 1]} : vector<8x384xf32> to vector<8x128xf32>
      %19 = vector.extract_strided_slice %12 {offsets = [0, 0], sizes = [8, 128], strides = [1, 1]} : vector<8x384xf32> to vector<8x128xf32>
      %20 = vector.extract_strided_slice %12 {offsets = [0, 128], sizes = [8, 128], strides = [1, 1]} : vector<8x384xf32> to vector<8x128xf32>
      %21 = vector.extract_strided_slice %12 {offsets = [0, 256], sizes = [8, 128], strides = [1, 1]} : vector<8x384xf32> to vector<8x128xf32>
      %22 = arith.addf %16, %19 : vector<8x128xf32>
      %23 = arith.negf %22 : vector<8x128xf32>
      %24 = math.exp %23 : vector<8x128xf32>
      %cst_13 = arith.constant 1.000000e+00 : f32
      %25 = vector.broadcast %cst_13 : f32 to vector<8x128xf32>
      %26 = arith.addf %25, %24 : vector<8x128xf32>
      %27 = arith.divf %25, %26 : vector<8x128xf32>
      %28 = arith.addf %17, %20 : vector<8x128xf32>
      %29 = arith.negf %28 : vector<8x128xf32>
      %30 = math.exp %29 : vector<8x128xf32>
      %cst_14 = arith.constant 1.000000e+00 : f32
      %31 = vector.broadcast %cst_14 : f32 to vector<8x128xf32>
      %32 = arith.addf %31, %30 : vector<8x128xf32>
      %33 = arith.divf %31, %32 : vector<8x128xf32>
      %34 = arith.mulf %27, %21 : vector<8x128xf32>
      %35 = arith.addf %18, %34 : vector<8x128xf32>
      %36 = math.tanh %35 : vector<8x128xf32>
      %37 = arith.subf %arg6, %36 : vector<8x128xf32>
      %38 = arith.mulf %33, %37 : vector<8x128xf32>
      %39 = arith.addf %36, %38 : vector<8x128xf32>
      scf.yield %39 : vector<8x128xf32>
    }
    %c8_i32_5 = arith.constant 8 : i32
    %c0_6 = arith.constant 0 : index
    %c0_7 = arith.constant 0 : index
    %c0_8 = arith.constant 0 : index
    %7 = vector.load %arg4[%c0_6, %c0_7, %c0_8] : memref<1x8x128xf32, #tpu.memory_space<vmem>>, vector<1x8x128xf32>
    %8 = vector.shape_cast %7 : vector<1x8x128xf32> to vector<8x128xf32>
    %9 = vector.shape_cast %6 : vector<8x128xf32> to vector<1x8x128xf32>
    tpu.vector_store %arg4[%c0_6, %c0_7, %c0_8], %9 {strides = array<i32>} : memref<1x8x128xf32, #tpu.memory_space<vmem>>, vector<1x8x128xf32>,
    return
  }
  func.func @transform_0(%arg0: i32) -> (i32, i32, i32, i32) {
    %c0_i32 = arith.constant 0 : i32
    %c0_i32_0 = arith.constant 0 : i32
    %c0_i32_1 = arith.constant 0 : i32
    %c0_i32_2 = arith.constant 0 : i32
    return %arg0, %c0_i32, %c0_i32_0, %c0_i32_1 : i32, i32, i32, i32
  }
  func.func @transform_1(%arg0: i32) -> (i32, i32, i32) {
    %c0_i32 = arith.constant 0 : i32
    %c0_i32_0 = arith.constant 0 : i32
    %c0_i32_1 = arith.constant 0 : i32
    return %arg0, %c0_i32, %c0_i32_0 : i32, i32, i32
  }
  func.func @transform_2(%arg0: i32) -> (i32, i32, i32) {
    %c0_i32 = arith.constant 0 : i32
    %c0_i32_0 = arith.constant 0 : i32
    %c0_i32_1 = arith.constant 0 : i32
    return %arg0, %c0_i32, %c0_i32_0 : i32, i32, i32
  }
  func.func @transform_3(%arg0: i32) -> (i32, i32, i32) {
    %c0_i32 = arith.constant 0 : i32
    %c0_i32_0 = arith.constant 0 : i32
    %c0_i32_1 = arith.constant 0 : i32
    return %arg0, %c0_i32, %c0_i32_0 : i32, i32, i32
  }
}

</mosaic_0001>

<llo_original>
// kernel: tpu_custom_call.1
$region0: #{tpu_custom_call.1}
  #allocation0 [shape = 'u32[]', space=smem, size = 0x4, offset = 0x4, fixed_abs, tag = 'smem constant byte address 0x4 - core index']
  #allocation1 [shape = 'u32[144,128]{1,0:T(1,128)}', space=vmem, size = 0x12000, scoped, tag = 'internal scratch']
  %s0 = inlined_call_operand.hbm [shape: f32[1,8,8,384], index: 0, kind: input, shape index: {}]
  %s1 = inlined_call_operand.hbm [shape: f32[1,128,384], index: 1, kind: input, shape index: {}]
  %s2 = inlined_call_operand.vmem [shape: f32[1,1,384], index: 2, kind: input, shape index: {}]
  %s3 = inlined_call_operand.hbm [shape: f32[1,8,128], index: 3, kind: output, shape index: {}]
  %s4 = sld [smem:[#allocation0]]
  $region37: #{tpu_custom_call.1} parent=0
    _
  %s6 = ssub.s32 1, %s4
  %s7 = scalar_select 0, %s6, %s4
  $region1: #{tpu_custom_call.1} parent=0
    #allocation2 [shape = 'u8[98304]{0}', space=vmem, size = 0x18000, scoped, tag = 'input window, operand 0, single buffered']
    #allocation3 [shape = 's32[1]{0}', space=sflag, size = 0x4, scoped, tag = 'scoped memory for tpu_custom_call.1']
    #allocation4 [shape = 's32[1]{0}', space=sflag, size = 0x4, scoped, tag = 'scoped memory for tpu_custom_call.1']
    #allocation5 [shape = 'u8[196608]{0}', space=vmem, size = 0x30000, scoped, tag = 'input window, operand 1, single buffered']
    #allocation6 [shape = 's32[1]{0}', space=sflag, size = 0x4, scoped, tag = 'scoped memory for tpu_custom_call.1']
    #allocation7 [shape = 'u8[4096]{0}', space=vmem, size = 0x1000, scoped, tag = 'output window, operand 0, single buffered']
    %8 = vsyncpa [#allocation3], 0
    %9 = vsyncpa [#allocation6], 0
    %10 = vsyncpa [#allocation4], 0
    // Predicated region
    $region2: #{tpu_custom_call.1} parent=1 // pred_check
      _
    $region3: #{tpu_custom_call.1} parent=1 // pred_check_branch
      %12 = sbr.rel (0) target = $region5
    $region4: #{tpu_custom_call.1} parent=1 // pred_region
      %s14 = ssub.s32 3072, 3072
      %15 = vsyncadd [#allocation3], %s14
      %s16 = sshll.u32 [#allocation2], 4
      %s17 = int_to_ptr.vmem [resolvable:$true] %s16
      %22 = dma.hbm_to_vmem [thread:$0]  %s0, 3072, %s17, [#allocation3], 384, 384, 24
    $region5: #{tpu_custom_call.1} parent=1 // pred_fallthru
      _
    // Predicated region
    $region6: #{tpu_custom_call.1} parent=1 // pred_check
      _
    $region7: #{tpu_custom_call.1} parent=1 // pred_check_branch
      %24 = sbr.rel (0) target = $region9
    $region8: #{tpu_custom_call.1} parent=1 // pred_region
      %s26 = ssub.s32 6144, 6144
      %27 = vsyncadd [#allocation6], %s26
      %s28 = sshll.u32 [#allocation5], 4
      %s29 = int_to_ptr.vmem [resolvable:$true] %s28
      %34 = dma.hbm_to_vmem [thread:$0]  %s1, 6144, %s29, [#allocation6], 384, 384, 24
    $region9: #{tpu_custom_call.1} parent=1 // pred_fallthru
      _
    // Predicated region
    $region10: #{tpu_custom_call.1} parent=1 // pred_check
      _
    $region11: #{tpu_custom_call.1} parent=1 // pred_check_branch
      %36 = sbr.rel (0) target = $region13
    $region12: #{tpu_custom_call.1} parent=1 // pred_region
      _
    $region13: #{tpu_custom_call.1} parent=1 // pred_fallthru
      _
    // Predicated region
    $region14: #{tpu_custom_call.1} parent=1 // pred_check
      _
    $region15: #{tpu_custom_call.1} parent=1 // pred_check_branch
      %38 = sbr.rel (0) target = $region17
    $region16: #{tpu_custom_call.1} parent=1 // pred_region
      %39 = dma.done [#allocation3], 3072
    $region17: #{tpu_custom_call.1} parent=1 // pred_fallthru
      _
    // Predicated region
    $region18: #{tpu_custom_call.1} parent=1 // pred_check
      _
    $region19: #{tpu_custom_call.1} parent=1 // pred_check_branch
      %41 = sbr.rel (0) target = $region21
    $region20: #{tpu_custom_call.1} parent=1 // pred_region
      %42 = dma.done [#allocation6], 6144
    $region21: #{tpu_custom_call.1} parent=1 // pred_fallthru
      _
    %v43 = vld [vmem:[#allocation5] sm:$0xff]
    %v44 = vld [vmem:[#allocation5 + $0x8] sm:$0xff]
    %v45 = vld [vmem:[#allocation5 + $0x10] sm:$0xff]
    %v46 = vld [vmem:[#allocation5 + $0x18] sm:$0xff]
    %v47 = vld [vmem:[#allocation5 + $0x20] sm:$0xff]
    %v48 = vld [vmem:[#allocation5 + $0x28] sm:$0xff]
    %v49 = vld [vmem:[#allocation5 + $0x30] sm:$0xff]
    %v50 = vld [vmem:[#allocation5 + $0x38] sm:$0xff]
    %v51 = vld [vmem:[#allocation5 + $0x40] sm:$0xff]
    %v52 = vld [vmem:[#allocation5 + $0x48] sm:$0xff]
    %v53 = vld [vmem:[#allocation5 + $0x50] sm:$0xff]
    %v54 = vld [vmem:[#allocation5 + $0x58] sm:$0xff]
    %v55 = vld [vmem:[#allocation5 + $0x60] sm:$0xff]
    %v56 = vld [vmem:[#allocation5 + $0x68] sm:$0xff]
    %v57 = vld [vmem:[#allocation5 + $0x70] sm:$0xff]
    %v58 = vld [vmem:[#allocation5 + $0x78] sm:$0xff]
    %v59 = vld [vmem:[#allocation5 + $0x80] sm:$0xff]
    %v60 = vld [vmem:[#allocation5 + $0x88] sm:$0xff]
    %v61 = vld [vmem:[#allocation5 + $0x90] sm:$0xff]
    %v62 = vld [vmem:[#allocation5 + $0x98] sm:$0xff]
    %v63 = vld [vmem:[#allocation5 + $0xa0] sm:$0xff]
    %v64 = vld [vmem:[#allocation5 + $0xa8] sm:$0xff]
    %v65 = vld [vmem:[#allocation5 + $0xb0] sm:$0xff]
    %v66 = vld [vmem:[#allocation5 + $0xb8] sm:$0xff]
    %v67 = vld [vmem:[#allocation5 + $0xc0] sm:$0xff]
    %v68 = vld [vmem:[#allocation5 + $0xc8] sm:$0xff]
    %v69 = vld [vmem:[#allocation5 + $0xd0] sm:$0xff]
    %v70 = vld [vmem:[#allocation5 + $0xd8] sm:$0xff]
    %v71 = vld [vmem:[#allocation5 + $0xe0] sm:$0xff]
    %v72 = vld [vmem:[#allocation5 + $0xe8] sm:$0xff]
    %v73 = vld [vmem:[#allocation5 + $0xf0] sm:$0xff]
    %v74 = vld [vmem:[#allocation5 + $0xf8] sm:$0xff]
    %v75 = vld [vmem:[#allocation5 + $0x100] sm:$0xff]
    %v76 = vld [vmem:[#allocation5 + $0x108] sm:$0xff]
    %v77 = vld [vmem:[#allocation5 + $0x110] sm:$0xff]
    %v78 = vld [vmem:[#allocation5 + $0x118] sm:$0xff]
    %v79 = vld [vmem:[#allocation5 + $0x120] sm:$0xff]
    %v80 = vld [vmem:[#allocation5 + $0x128] sm:$0xff]
    %v81 = vld [vmem:[#allocation5 + $0x130] sm:$0xff]
    %v82 = vld [vmem:[#allocation5 + $0x138] sm:$0xff]
    %v83 = vld [vmem:[#allocation5 + $0x140] sm:$0xff]
    %v84 = vld [vmem:[#allocation5 + $0x148] sm:$0xff]
    %v85 = vld [vmem:[#allocation5 + $0x150] sm:$0xff]
    %v86 = vld [vmem:[#allocation5 + $0x158] sm:$0xff]
    %v87 = vld [vmem:[#allocation5 + $0x160] sm:$0xff]
    %v88 = vld [vmem:[#allocation5 + $0x168] sm:$0xff]
    %v89 = vld [vmem:[#allocation5 + $0x170] sm:$0xff]
    %v90 = vld [vmem:[#allocation5 + $0x178] sm:$0xff]
    %v91 = vld [vmem:[%s2] sm:$0x7]
    loop: start=0, step=1, limit=8
    $region22: #{tpu_custom_call.1} parent=1 // loop_pre_header
      _
    $region23: #{tpu_custom_call.1} parent=1 // loop_header
      %s93 = sphi 0, %s97
      %p94 = scmp.ge.s32.totalorder %s93, 8
      %v98 = vphi 0.0, %v281
    $region24: #{tpu_custom_call.1} parent=1 // loop_header_branch
      %96 = sbr.rel (%p94) target = $region28
    $region25: #{tpu_custom_call.1} parent=1 // loop_body
      %v100 = vlaneseq
      %v101 = vshrl.u32 %v100, 7
      %v102 = vsub.s32 0, %v101
      %v103 = vrot.slane %v91, %v102
      %v104 = vlaneseq
      %v105 = vshrl.u32 %v104, 7
      %v106 = vsub.s32 1, %v105
      %v107 = vrot.slane %v91, %v106
      %v108 = vlaneseq
      %v109 = vshrl.u32 %v108, 7
      %v110 = vsub.s32 2, %v109
      %v111 = vrot.slane %v91, %v110
      %115 = vmatprep.subr.mxu0 %v44
      %116 = vmatpush1.msra.mxu0 %v43
      %117 = vmatprep.subr.mxu0 %v47
      %118 = vmatpush1.msra.mxu0 %v46
      %119 = vmatprep.subr.mxu0 %v50
      %120 = vmatpush1.msra.mxu0 %v49
      %121 = vmatprep.subr.mxu0 %v53
      %122 = vmatpush1.msra.mxu0 %v52
      %123 = vmatprep.subr.mxu0 %v56
      %124 = vmatpush1.msra.mxu0 %v55
      %125 = vmatprep.subr.mxu0 %v59
      %126 = vmatpush1.msra.mxu0 %v58
      %127 = vmatprep.subr.mxu0 %v62
      %128 = vmatpush1.msra.mxu0 %v61
      %129 = vmatprep.subr.mxu0 %v65
      %130 = vmatpush1.msra.mxu0 %v64
      %131 = vmatprep.subr.mxu0 %v68
      %132 = vmatpush1.msra.mxu0 %v67
      %133 = vmatprep.subr.mxu0 %v71
      %134 = vmatpush1.msra.mxu0 %v70
      %135 = vmatprep.subr.mxu0 %v74
      %136 = vmatpush1.msra.mxu0 %v73
      %137 = vmatprep.subr.mxu0 %v77
      %138 = vmatpush1.msra.mxu0 %v76
      %139 = vmatprep.subr.mxu0 %v80
      %140 = vmatpush1.msra.mxu0 %v79
      %141 = vmatprep.subr.mxu0 %v83
      %142 = vmatpush1.msra.mxu0 %v82
      %143 = vmatprep.subr.mxu0 %v86
      %144 = vmatpush1.msra.mxu0 %v85
      %145 = vmatprep.subr.mxu0 %v89
      %146 = vmatpush1.msra.mxu0 %v88
      %147 = vmatprep.subr.mxu0 0.0
      %148 = vmatpush1.msra.mxu0 0.0
      %149 = vmatprep.subr.mxu0 0.0
      %150 = vmatpush1.msra.mxu0 0.0
      %151 = vmatprep.subr.mxu0 0.0
      %152 = vmatpush1.msra.mxu0 0.0
      %153 = vmatprep.subr.mxu0 0.0
      %154 = vmatpush1.msra.mxu0 0.0
      %155 = vmatprep.subr.mxu0 0.0
      %156 = vmatpush1.msra.mxu0 0.0
      %157 = vmatprep.subr.mxu0 0.0
      %158 = vmatpush1.msra.mxu0 0.0
      %159 = vmatprep.subr.mxu0 0.0
      %160 = vmatpush1.msra.mxu0 0.0
      %161 = vmatprep.subr.mxu0 0.0
      %162 = vmatpush1.msra.mxu0 0.0
      %163 = vmatprep.subr.mxu0 0.0
      %164 = vmatpush1.msra.mxu0 0.0
      %165 = vmatprep.subr.mxu0 0.0
      %166 = vmatpush1.msra.mxu0 0.0
      %167 = vmatprep.subr.mxu0 0.0
      %168 = vmatpush1.msra.mxu0 0.0
      %169 = vmatprep.subr.mxu0 0.0
      %170 = vmatpush1.msra.mxu0 0.0
      %171 = vmatprep.subr.mxu0 0.0
      %172 = vmatpush1.msra.mxu0 0.0
      %173 = vmatprep.subr.mxu0 0.0
      %174 = vmatpush1.msra.mxu0 0.0
      %175 = vmatprep.subr.mxu0 0.0
      %176 = vmatpush1.msra.mxu0 0.0
      %177 = vmatprep.subr.mxu0 0.0
      %178 = vmatpush1.msra.mxu0 0.0
      %179 = vmatprep.mubr.f32.mxu0 0.0
      %180 = vmatmul.mubr.f32.gmra.mrb[0].mxu0 %v98
      %v181 = vpop.f32.mrb[0].mxu0
      %v182 = vadd.f32 %v103, %v181
      %v183 = vpop.f32.mrb[0].mxu0
      %v184 = vadd.f32 %v107, %v183
      %185 = vdwg.mxu0
      %186 = vmatprep.subr.mxu0 0.0
      %187 = vmatpush1.msra.mxu0 %v45
      %188 = vmatprep.subr.mxu0 0.0
      %189 = vmatpush1.msra.mxu0 %v48
      %190 = vmatprep.subr.mxu0 0.0
      %191 = vmatpush1.msra.mxu0 %v51
      %192 = vmatprep.subr.mxu0 0.0
      %193 = vmatpush1.msra.mxu0 %v54
      %194 = vmatprep.subr.mxu0 0.0
      %195 = vmatpush1.msra.mxu0 %v57
      %196 = vmatprep.subr.mxu0 0.0
      %197 = vmatpush1.msra.mxu0 %v60
      %198 = vmatprep.subr.mxu0 0.0
      %199 = vmatpush1.msra.mxu0 %v63
      %200 = vmatprep.subr.mxu0 0.0
      %201 = vmatpush1.msra.mxu0 %v66
      %202 = vmatprep.subr.mxu0 0.0
      %203 = vmatpush1.msra.mxu0 %v69
      %204 = vmatprep.subr.mxu0 0.0
      %205 = vmatpush1.msra.mxu0 %v72
      %206 = vmatprep.subr.mxu0 0.0
      %207 = vmatpush1.msra.mxu0 %v75
      %208 = vmatprep.subr.mxu0 0.0
      %209 = vmatpush1.msra.mxu0 %v78
      %210 = vmatprep.subr.mxu0 0.0
      %211 = vmatpush1.msra.mxu0 %v81
      %212 = vmatprep.subr.mxu0 0.0
      %213 = vmatpush1.msra.mxu0 %v84
      %214 = vmatprep.subr.mxu0 0.0
      %215 = vmatpush1.msra.mxu0 %v87
      %216 = vmatprep.subr.mxu0 0.0
      %217 = vmatpush1.msra.mxu0 %v90
      %218 = vmatprep.subr.mxu0 0.0
      %219 = vmatpush1.msra.mxu0 0.0
      %220 = vmatprep.subr.mxu0 0.0
      %221 = vmatpush1.msra.mxu0 0.0
      %222 = vmatprep.subr.mxu0 0.0
      %223 = vmatpush1.msra.mxu0 0.0
      %224 = vmatprep.subr.mxu0 0.0
      %225 = vmatpush1.msra.mxu0 0.0
      %226 = vmatprep.subr.mxu0 0.0
      %227 = vmatpush1.msra.mxu0 0.0
      %228 = vmatprep.subr.mxu0 0.0
      %229 = vmatpush1.msra.mxu0 0.0
      %230 = vmatprep.subr.mxu0 0.0
      %231 = vmatpush1.msra.mxu0 0.0
      %232 = vmatprep.subr.mxu0 0.0
      %233 = vmatpush1.msra.mxu0 0.0
      %234 = vmatprep.subr.mxu0 0.0
      %235 = vmatpush1.msra.mxu0 0.0
      %236 = vmatprep.subr.mxu0 0.0
      %237 = vmatpush1.msra.mxu0 0.0
      %238 = vmatprep.subr.mxu0 0.0
      %239 = vmatpush1.msra.mxu0 0.0
      %240 = vmatprep.subr.mxu0 0.0
      %241 = vmatpush1.msra.mxu0 0.0
      %242 = vmatprep.subr.mxu0 0.0
      %243 = vmatpush1.msra.mxu0 0.0
      %244 = vmatprep.subr.mxu0 0.0
      %245 = vmatpush1.msra.mxu0 0.0
      %246 = vmatprep.subr.mxu0 0.0
      %247 = vmatpush1.msra.mxu0 0.0
      %248 = vmatprep.subr.mxu0 0.0
      %249 = vmatpush1.msra.mxu0 0.0
      %250 = vmatprep.mubr.f32.mxu0 0.0
      %251 = vmatmul.mubr.f32.gmra.mrb[0].mxu0 %v98
      %v252 = vpop.f32.mrb[0].mxu0
      %v253 = vadd.f32 %v111, %v252
      %v254 = vpop.f32.mrb[0].mxu0
      %255 = vdwg.mxu0
      %s256 = smul.u32 %s93, 3
      %s257 = smul.addr %s256, 8
      %s258 = scalar_lea.vmem [#allocation2], %s257
      %v259 = vld [vmem:[%s258] sm:$0xff]
      %v260 = vld [vmem:[%s258 + $0x8] sm:$0xff]
      %v261 = vld [vmem:[%s258 + $0x10] sm:$0xff]
      %v262 = vadd.f32 %v259, %v182
      %v263 = vxor.u32 %v262, 2147483648
      %v264 = vmul.f32 %v263, 1.442695
      %v265 = vpow.pop %v264
      %v266 = vadd.f32 %v265, 1.0
      %v267 = vrcp.pop %v266
      %v268 = vmul.f32 1.0, %v267
      %v269 = vadd.f32 %v260, %v184
      %v270 = vxor.u32 %v269, 2147483648
      %v271 = vmul.f32 %v270, 1.442695
      %v272 = vpow.pop %v271
      %v273 = vadd.f32 %v272, 1.0
      %v274 = vrcp.pop %v273
      %v275 = vmul.f32 1.0, %v274
      %v276 = vmul.f32 %v268, %v253
      %v277 = vadd.f32 %v261, %v276
      %v278 = vtanh.pop %v277
      %v279 = vsub.f32 %v98, %v278
      %v280 = vmul.f32 %v275, %v279
      %v281 = vadd.f32 %v278, %v280
    $region26: #{tpu_custom_call.1} parent=1 // loop_footer
      %s97 = sadd.s32 1, %s93
    $region27: #{tpu_custom_call.1} parent=1 // loop_footer_branch
      %92 = sbr.rel target = $region23
    $region28: #{tpu_custom_call.1} parent=1 // loop_exit
      _
    %282 = vst [vmem:[#allocation7] sm:$0xff] %v98
    // Predicated region
    $region29: #{tpu_custom_call.1} parent=1 // pred_check
      _
    $region30: #{tpu_custom_call.1} parent=1 // pred_check_branch
      %284 = sbr.rel (0) target = $region32
    $region31: #{tpu_custom_call.1} parent=1 // pred_region
      %s286 = ssub.s32 128, 128
      %287 = vsyncadd [#allocation4], %s286
      %s289 = sshll.u32 [#allocation7], 4
      %s290 = int_to_ptr.vmem [resolvable:$true] %s289
      %292 = dma.vmem_to_hbm [thread:$0]  %s290, 128, %s3, [#allocation4]
    $region32: #{tpu_custom_call.1} parent=1 // pred_fallthru
      _
    // Predicated region
    $region33: #{tpu_custom_call.1} parent=1 // pred_check
      _
    $region34: #{tpu_custom_call.1} parent=1 // pred_check_branch
      %294 = sbr.rel (0) target = $region36
    $region35: #{tpu_custom_call.1} parent=1 // pred_region
      %295 = dma.done [#allocation4], 128
    $region36: #{tpu_custom_call.1} parent=1 // pred_fallthru
      _
    %296 = vsyncpa [#allocation3], 1
    %297 = vsyncpa [#allocation6], 1
    %298 = vsyncpa [#allocation4], 1

</llo_original>
